<compile_context>
chip_gen: v6e
topology: v6e:2x2x1
jax: 0.10.0
libtpu: 0.0.40
codegen_flags: <defaults>
</compile_context>

<pallas_src>
import functools
import math

import jax
import jax.numpy as jnp
from jax import lax
from jax.experimental import pallas as pl
from jax.experimental.pallas import tpu as pltpu

_LOG_CLAMP = math.log(1e-6)  # log of the clamp floor


def _focal_kernel(*refs, gamma, n_classes, hw, tl, chunk, has_mask):
    if has_mask:
        x_ref, t_ref, alpha_ref, m_ref, lsum_ref, wsum_ref = refs
    else:
        x_ref, t_ref, alpha_ref, lsum_ref, wsum_ref = refs
        m_ref = None

    tile_base = pl.program_id(1) * tl
    n_chunks = tl // chunk

    # Loop-invariant values hoisted out of the chunk loop.
    cls_iota = lax.broadcasted_iota(jnp.int32, (n_classes, chunk), 0)
    lane_iota = lax.broadcasted_iota(jnp.int32, (1, chunk), 1)
    alphas = [alpha_ref[c] for c in range(n_classes)]   # scalar SMEM reads

    def body(i, carry):
        acc_l, acc_w = carry
        off = pl.multiple_of(i * chunk, chunk)

        x2d = x_ref[0, :, pl.ds(off, chunk)].astype(jnp.float32)   # (C, chunk)
        t = t_ref[0, :, pl.ds(off, chunk)].astype(jnp.int32)       # (1, chunk)

        # log-sum-exp over classes: cheap sublane reductions on dense vregs.
        m = jnp.max(x2d, axis=0, keepdims=True)
        s = jnp.sum(jnp.exp(x2d - m), axis=0, keepdims=True)
        lse = m + jnp.log(s)

        # Target logit via one-hot sublane sum; alpha via per-class selects.
        onehot = cls_iota == t
        x_t = jnp.sum(jnp.where(onehot, x2d, 0.0), axis=0, keepdims=True)
        a_t = jnp.zeros((1, chunk), jnp.float32)
        for c in range(n_classes):
            a_t = jnp.where(t == c, alphas[c], a_t)
        # NOTE: targets outside [0, n_classes) get a_t == 0 -> zero loss
        # contribution (the torch reference would index out of bounds instead).

        logp_t = x_t - lse                       # log softmax at target class
        p_t = jnp.exp(logp_t)                    # unclamped (matches torch pow arg)
        logp = jnp.maximum(logp_t, _LOG_CLAMP)   # == log(clamp(p_t, 1e-6))

        one_minus = 1.0 - p_t
        if gamma == 0.0:                         # gamma is static: specialize
            w = jnp.ones_like(one_minus)
        elif gamma == 1.0:
            w = one_minus
        elif gamma == 2.0:
            w = one_minus * one_minus
        else:
            w = jnp.power(one_minus, gamma)      # generic gamma on the EUP

        loss = -w * logp * a_t                   # (1, chunk)

        # Mask out padded tail lanes (and apply the optional user mask).
        valid = (lane_iota + (tile_base + off)) < hw
        if has_mask:
            mval = m_ref[0, :, pl.ds(off, chunk)].astype(jnp.float32)
            acc_l = acc_l + jnp.where(valid, loss * mval, 0.0)
            acc_w = acc_w + jnp.where(valid, mval, 0.0)
        else:
            acc_l = acc_l + jnp.where(valid, loss, 0.0)
            acc_w = acc_w + jnp.where(valid, 1.0, 0.0)
        return acc_l, acc_w

    init = (jnp.zeros((1, chunk), jnp.float32),
            jnp.zeros((1, chunk), jnp.float32))
    acc_l, acc_w = lax.fori_loop(0, n_chunks, body, init)

    # One cross-lane reduce per grid step; store as a lane-dense 128-wide row.
    lsum_ref[0, 0, :, :] = jnp.broadcast_to(
        jnp.sum(acc_l, axis=-1, keepdims=True), (1, 128))
    wsum_ref[0, 0, :, :] = jnp.broadcast_to(
        jnp.sum(acc_w, axis=-1, keepdims=True), (1, 128))


def _round_up(a, b):
    return -(-a // b) * b


def focal_softmax_loss(x, target, alpha_vec, gamma=1.0, mask=None):
    """Forward of FocalSoftmaxLoss (softmax=True path). Returns the scalar loss.

    x: (N, C, H, W) / (N, C, ...) or (N, C) logits.
    target: (N, H, W) / (N, ...) or (N,) integer class ids.
    alpha_vec: (C,) per-class weights. mask: optional, same layout as target.
    """
    # TODO(synk): softmax=False (probabilities passed in directly) path not kernelized.
    if x.ndim > 2:
        N, C = int(x.shape[0]), int(x.shape[1])
        HW = 1
        for d in x.shape[2:]:
            HW *= int(d)
        xl = x.reshape(N, C, HW)                 # no HBM transpose
        tgt = target.reshape(N, 1, HW)
    else:
        # TODO(synk): the 2-D (N, C) path pays one HBM transpose of the logits;
        # a dedicated pixels-on-sublanes kernel would avoid it.
        C = int(x.shape[1])
        N, HW = 1, int(x.shape[0])
        xl = x.T.reshape(1, C, HW)
        tgt = target.reshape(1, 1, HW)

    if not jnp.issubdtype(tgt.dtype, jnp.integer) or tgt.dtype.itemsize > 4:
        tgt = tgt.astype(jnp.int32)
    # sub-32-bit integer targets pass through unchanged (less HBM traffic).

    has_mask = mask is not None
    if has_mask:
        mk = mask.reshape(N, 1, HW)
        if mk.dtype != jnp.float32:
            mk = mk.astype(jnp.float32)

    # ---- Tile selection: HBM-bound kernel -> big lane tiles, VMEM-aware,
    # and enough grid steps for pipelining / the two v7x TensorCores. ----
    hw128 = _round_up(HW, 128)
    chunk = min(512, hw128)                                  # inner lane chunk
    x_bytes = xl.dtype.itemsize
    t_bytes = tgt.dtype.itemsize
    m_bytes = 4 if has_mask else 0
    bytes_per_lane = C * x_bytes + t_bytes + m_bytes

    tl = (1 << 20) // max(1, C * x_bytes)                    # ~1 MiB of logits/step
    tl = min(tl, (10 << 20) // (2 * bytes_per_lane))         # 2x-buffered <= ~10 MiB
    tl = max(chunk, (tl // chunk) * chunk)
    tl = min(tl, _round_up(hw128, chunk))                    # at most ~one row

    min_steps = 8
    if N * pl.cdiv(HW, tl) < min_steps and tl > chunk:
        want_nt = pl.cdiv(min_steps, N)
        tl = min(tl, max(chunk, _round_up(pl.cdiv(HW, want_nt), chunk)))
    nt = pl.cdiv(HW, tl)

    block_bytes = bytes_per_lane * tl
    vmem_limit = int(min(64 << 20, max(16 << 20, 4 * block_bytes + (2 << 20))))

    grid = (N, nt)
    alpha_sm = alpha_vec.reshape(C).astype(jnp.float32)

    in_specs = [
        pl.BlockSpec((1, C, tl), lambda n, t: (n, 0, t)),
        pl.BlockSpec((1, 1, tl), lambda n, t: (n, 0, t)),
        pl.BlockSpec(memory_space=pltpu.MemorySpace.SMEM),
    ]
    inputs = [xl, tgt, alpha_sm]
    if has_mask:
        in_specs.append(pl.BlockSpec((1, 1, tl), lambda n, t: (n, 0, t)))
        inputs.append(mk)

    out_shape = (jax.ShapeDtypeStruct((N, nt, 1, 128), jnp.float32),
                 jax.ShapeDtypeStruct((N, nt, 1, 128), jnp.float32))
    out_specs = (pl.BlockSpec((1, 1, 1, 128), lambda n, t: (n, t, 0, 0)),
                 pl.BlockSpec((1, 1, 1, 128), lambda n, t: (n, t, 0, 0)))

    kernel = functools.partial(
        _focal_kernel, gamma=float(gamma), n_classes=C, hw=HW, tl=tl,
        chunk=chunk, has_mask=has_mask)

    lsum, wsum = pl.pallas_call(
        kernel,
        out_shape=out_shape,
        grid_spec=pltpu.PrefetchScalarGridSpec(
            num_scalar_prefetch=0,
            grid=grid,
            in_specs=in_specs,
            out_specs=out_specs),
        compiler_params=pltpu.CompilerParams(
            dimension_semantics=("parallel", "parallel"),
            vmem_limit_bytes=vmem_limit),
    )(*inputs)

    total_loss = jnp.sum(lsum[:, :, 0, 0])
    total_weight = jnp.sum(wsum[:, :, 0, 0])   # = N*HW (no mask) or sum(mask)
    return total_loss / total_weight


def _make_alpha(n_classes, alpha=0.8):
    # matches FocalSoftmaxLoss.__init__ for scalar alpha
    a = jnp.zeros((n_classes,), jnp.float32)
    a = a.at[0].set(alpha)
    a = a.at[1:].set(1.0 - alpha)
    return a


def _reference(x, target, alpha_vec, gamma=1.0, mask=None):
    N, C = x.shape[0], x.shape[1]
    pred = x.reshape(N, C, -1).transpose(0, 2, 1).reshape(-1, C)
    t = target.reshape(-1).astype(jnp.int32)
    p = jax.nn.softmax(pred, axis=1)
    p_t = jnp.take_along_axis(p, t[:, None], axis=1)[:, 0]
    a_t = alpha_vec[t]
    logp = jnp.log(jnp.clip(p_t, 1e-6))
    loss = -((1.0 - p_t) ** gamma) * logp * a_t
    if mask is not None:
        m = mask.reshape(-1).astype(jnp.float32)
        return jnp.sum(loss * m) / jnp.sum(m)
    return jnp.mean(loss)


if __name__ == "__main__":
    key = jax.random.PRNGKey(0)
    kx, kt, km, kx2, kt2 = jax.random.split(key, 5)

    # Main shape: N=2, C=4, 16x16 spatial.
    N, C, H, W = 2, 4, 16, 16
    x = jax.random.normal(kx, (N, C, H, W), dtype=jnp.float32)
    target = jax.random.randint(kt, (N, H, W), 0, C, dtype=jnp.int32)
    alpha_vec = _make_alpha(C, alpha=0.8)

    out = jax.block_until_ready(focal_softmax_loss(x, target, alpha_vec, gamma=1.0))
    ref = _reference(x, target, alpha_vec, gamma=1.0)
    assert jnp.allclose(out, ref, rtol=1e-4, atol=1e-5), (out, ref)

    # Masked-mean path (fused in-kernel).
    mask = (jax.random.uniform(km, (N, H, W)) > 0.3).astype(jnp.float32)
    out_m = jax.block_until_ready(
        focal_softmax_loss(x, target, alpha_vec, gamma=1.0, mask=mask))
    ref_m = _reference(x, target, alpha_vec, gamma=1.0, mask=mask)
    assert jnp.allclose(out_m, ref_m, rtol=1e-4, atol=1e-5), (out_m, ref_m)

    # Odd spatial size (13x13): exercises the pad-free tail-lane masking and
    # the gamma=2 specialization.
    H2 = W2 = 13
    x2 = jax.random.normal(kx2, (N, C, H2, W2), dtype=jnp.float32)
    target2 = jax.random.randint(kt2, (N, H2, W2), 0, C, dtype=jnp.int32)
    out2 = jax.block_until_ready(
        focal_softmax_loss(x2, target2, alpha_vec, gamma=2.0))
    ref2 = _reference(x2, target2, alpha_vec, gamma=2.0)
    assert jnp.allclose(out2, ref2, rtol=1e-4, atol=1e-5), (out2, ref2)

    print("KERNEL_OK")
</pallas_src>

<mosaic_0001>
module attributes {stable_mosaic.version = 11 : i64} {
  func.func @_focal_kernel(%arg0: i32, %arg1: i32, %arg2: memref<1x4x256xf32, #tpu.memory_space<vmem>>, %arg3: memref<1x1x256xi32, #tpu.memory_space<vmem>>, %arg4: memref<4xf32, #tpu.memory_space<smem>>, %arg5: memref<1x1x1x128xf32, #tpu.memory_space<vmem>>, %arg6: memref<1x1x1x128xf32, #tpu.memory_space<vmem>>) attributes {dimension_semantics = [#tpu.dimension_semantics<parallel>, #tpu.dimension_semantics<parallel>], iteration_bounds = array<i64: 2, 1>, scalar_prefetch = 0 : i64, scratch_operands = 0 : i64, tpu.core_type = #tpu.core_type<tc>, window_params = [{transform_indices = @transform_0, window_bounds = array<i64: 1, 4, 256>}, {transform_indices = @transform_1, window_bounds = array<i64: 1, 1, 256>}, {transform_indices = @transform_2, window_bounds = array<i64: 4>}, {transform_indices = @transform_3, window_bounds = array<i64: 1, 1, 1, 128>}, {transform_indices = @transform_4, window_bounds = array<i64: 1, 1, 1, 128>}]} {
    %c256_i32 = arith.constant 256 : i32
    %0 = arith.muli %arg1, %c256_i32 : i32
    %1 = tpu.iota {dimensions = array<i32: 0>} : vector<4x256xi32>
    %2 = tpu.iota {dimensions = array<i32: 1>} : vector<1x256xi32>
    %c0 = arith.constant 0 : index
    %3 = memref.load %arg4[%c0] : memref<4xf32, #tpu.memory_space<smem>>
    %c1 = arith.constant 1 : index
    %4 = memref.load %arg4[%c1] : memref<4xf32, #tpu.memory_space<smem>>
    %c2 = arith.constant 2 : index
    %5 = memref.load %arg4[%c2] : memref<4xf32, #tpu.memory_space<smem>>
    %c3 = arith.constant 3 : index
    %6 = memref.load %arg4[%c3] : memref<4xf32, #tpu.memory_space<smem>>
    %cst = arith.constant 0.000000e+00 : f32
    %7 = vector.broadcast %cst : f32 to vector<1x256xf32>
    %cst_0 = arith.constant 0.000000e+00 : f32
    %8 = vector.broadcast %cst_0 : f32 to vector<1x256xf32>
    %c0_i32 = arith.constant 0 : i32
    %c256_i32_1 = arith.constant 256 : i32
    %9 = arith.muli %c0_i32, %c256_i32_1 : i32
    %10 = tpu.assume_multiple %9, 256 : i32
    %c0_2 = arith.constant 0 : index
    %c0_3 = arith.constant 0 : index
    %11 = arith.index_cast %10 : i32 to index
    %12 = vector.load %arg2[%c0_2, %c0_3, %11] : memref<1x4x256xf32, #tpu.memory_space<vmem>>, vector<1x4x256xf32>
    %13 = vector.shape_cast %12 : vector<1x4x256xf32> to vector<4x256xf32>
    %c0_4 = arith.constant 0 : index
    %c0_5 = arith.constant 0 : index
    %14 = arith.index_cast %10 : i32 to index
    %15 = vector.load %arg3[%c0_4, %c0_5, %14] : memref<1x1x256xi32, #tpu.memory_space<vmem>>, vector<1x1x256xi32>
    %16 = vector.shape_cast %15 : vector<1x1x256xi32> to vector<1x256xi32>
    %cst_6 = arith.constant dense<0xFF800000> : vector<256xf32>
    %17 = vector.multi_reduction <maximumf>, %13, %cst_6 [0] : vector<4x256xf32> to vector<256xf32>
    %18 = vector.shape_cast %17 : vector<256xf32> to vector<1x256xf32>
    %19 = vector.broadcast %18 : vector<1x256xf32> to vector<4x256xf32>
    %20 = arith.subf %13, %19 : vector<4x256xf32>
    %21 = math.exp %20 : vector<4x256xf32>
    %cst_7 = arith.constant dense<0.000000e+00> : vector<256xf32>
    %22 = vector.multi_reduction <add>, %21, %cst_7 [0] : vector<4x256xf32> to vector<256xf32>
    %23 = vector.shape_cast %22 : vector<256xf32> to vector<1x256xf32>
    %24 = math.log %23 : vector<1x256xf32>
    %25 = arith.addf %18, %24 : vector<1x256xf32>
    %26 = vector.broadcast %16 : vector<1x256xi32> to vector<4x256xi32>
    %27 = arith.cmpi eq, %1, %26 : vector<4x256xi32>
    %cst_8 = arith.constant 0.000000e+00 : f32
    %28 = vector.broadcast %cst_8 : f32 to vector<4x256xf32>
    %29 = arith.select %27, %13, %28 : vector<4x256xi1>, vector<4x256xf32>
    %cst_9 = arith.constant dense<0.000000e+00> : vector<256xf32>
    %30 = vector.multi_reduction <add>, %29, %cst_9 [0] : vector<4x256xf32> to vector<256xf32>
    %31 = vector.shape_cast %30 : vector<256xf32> to vector<1x256xf32>
    %cst_10 = arith.constant 0.000000e+00 : f32
    %32 = vector.broadcast %cst_10 : f32 to vector<1x256xf32>
    %c0_i32_11 = arith.constant 0 : i32
    %33 = vector.broadcast %c0_i32_11 : i32 to vector<1x256xi32>
    %34 = arith.cmpi eq, %16, %33 : vector<1x256xi32>
    %35 = vector.broadcast %3 : f32 to vector<1x256xf32>
    %36 = arith.select %34, %35, %32 : vector<1x256xi1>, vector<1x256xf32>
    %c1_i32 = arith.constant 1 : i32
    %37 = vector.broadcast %c1_i32 : i32 to vector<1x256xi32>
    %38 = arith.cmpi eq, %16, %37 : vector<1x256xi32>
    %39 = vector.broadcast %4 : f32 to vector<1x256xf32>
    %40 = arith.select %38, %39, %36 : vector<1x256xi1>, vector<1x256xf32>
    %c2_i32 = arith.constant 2 : i32
    %41 = vector.broadcast %c2_i32 : i32 to vector<1x256xi32>
    %42 = arith.cmpi eq, %16, %41 : vector<1x256xi32>
    %43 = vector.broadcast %5 : f32 to vector<1x256xf32>
    %44 = arith.select %42, %43, %40 : vector<1x256xi1>, vector<1x256xf32>
    %c3_i32 = arith.constant 3 : i32
    %45 = vector.broadcast %c3_i32 : i32 to vector<1x256xi32>
    %46 = arith.cmpi eq, %16, %45 : vector<1x256xi32>
    %47 = vector.broadcast %6 : f32 to vector<1x256xf32>
    %48 = arith.select %46, %47, %44 : vector<1x256xi1>, vector<1x256xf32>
    %49 = arith.subf %31, %25 : vector<1x256xf32>
    %50 = math.exp %49 : vector<1x256xf32>
    %cst_12 = arith.constant -13.8155107 : f32
    %51 = vector.broadcast %cst_12 : f32 to vector<1x256xf32>
    %52 = arith.maximumf %49, %51 : vector<1x256xf32>
    %cst_13 = arith.constant 1.000000e+00 : f32
    %53 = vector.broadcast %cst_13 : f32 to vector<1x256xf32>
    %54 = arith.subf %53, %50 : vector<1x256xf32>
    %cst_14 = arith.constant 0.000000e+00 : f32
    %55 = vector.broadcast %cst_14 : f32 to vector<1x256xf32>
    %56 = arith.subf %55, %54 : vector<1x256xf32>
    %57 = arith.mulf %56, %52 : vector<1x256xf32>
    %58 = arith.mulf %57, %48 : vector<1x256xf32>
    %59 = arith.addi %0, %10 : i32
    %60 = vector.broadcast %59 : i32 to vector<1x256xi32>
    %61 = arith.addi %2, %60 : vector<1x256xi32>
    %c256_i32_15 = arith.constant 256 : i32
    %62 = vector.broadcast %c256_i32_15 : i32 to vector<1x256xi32>
    %63 = arith.cmpi slt, %61, %62 : vector<1x256xi32>
    %cst_16 = arith.constant 0.000000e+00 : f32
    %64 = vector.broadcast %cst_16 : f32 to vector<1x256xf32>
    %65 = arith.select %63, %58, %64 : vector<1x256xi1>, vector<1x256xf32>
    %66 = arith.addf %7, %65 : vector<1x256xf32>
    %cst_17 = arith.constant 1.000000e+00 : f32
    %cst_18 = arith.constant 0.000000e+00 : f32
    %67 = vector.broadcast %cst_17 : f32 to vector<1x256xf32>
    %68 = vector.broadcast %cst_18 : f32 to vector<1x256xf32>
    %69 = arith.select %63, %67, %68 : vector<1x256xi1>, vector<1x256xf32>
    %70 = arith.addf %8, %69 : vector<1x256xf32>
    %c1_i32_19 = arith.constant 1 : i32
    %cst_20 = arith.constant dense<0.000000e+00> : vector<1xf32>
    %71 = vector.multi_reduction <add>, %66, %cst_20 [1] : vector<1x256xf32> to vector<1xf32>
    %72 = vector.shape_cast %71 : vector<1xf32> to vector<1x1xf32>
    %73 = vector.shape_cast %72 : vector<1x1xf32> to vector<1x1xf32>
    %74 = vector.broadcast %73 : vector<1x1xf32> to vector<1x128xf32>
    %c0_21 = arith.constant 0 : index
    %c0_22 = arith.constant 0 : index
    %c0_23 = arith.constant 0 : index
    %c0_24 = arith.constant 0 : index
    %75 = vector.load %arg5[%c0_21, %c0_22, %c0_23, %c0_24] : memref<1x1x1x128xf32, #tpu.memory_space<vmem>>, vector<1x1x1x128xf32>
    %76 = vector.shape_cast %75 : vector<1x1x1x128xf32> to vector<1x128xf32>
    %77 = vector.shape_cast %74 : vector<1x128xf32> to vector<1x1x1x128xf32>
    tpu.vector_store %arg5[%c0_21, %c0_22, %c0_23, %c0_24], %77 {strides = array<i32>} : memref<1x1x1x128xf32, #tpu.memory_space<vmem>>, vector<1x1x1x128xf32>,
    %cst_25 = arith.constant dense<0.000000e+00> : vector<1xf32>
    %78 = vector.multi_reduction <add>, %70, %cst_25 [1] : vector<1x256xf32> to vector<1xf32>
    %79 = vector.shape_cast %78 : vector<1xf32> to vector<1x1xf32>
    %80 = vector.shape_cast %79 : vector<1x1xf32> to vector<1x1xf32>
    %81 = vector.broadcast %80 : vector<1x1xf32> to vector<1x128xf32>
    %c0_26 = arith.constant 0 : index
    %c0_27 = arith.constant 0 : index
    %c0_28 = arith.constant 0 : index
    %c0_29 = arith.constant 0 : index
    %82 = vector.load %arg6[%c0_26, %c0_27, %c0_28, %c0_29] : memref<1x1x1x128xf32, #tpu.memory_space<vmem>>, vector<1x1x1x128xf32>
    %83 = vector.shape_cast %82 : vector<1x1x1x128xf32> to vector<1x128xf32>
    %84 = vector.shape_cast %81 : vector<1x128xf32> to vector<1x1x1x128xf32>
    tpu.vector_store %arg6[%c0_26, %c0_27, %c0_28, %c0_29], %84 {strides = array<i32>} : memref<1x1x1x128xf32, #tpu.memory_space<vmem>>, vector<1x1x1x128xf32>,
    return
  }
  func.func @transform_0(%arg0: i32, %arg1: i32) -> (i32, i32, i32) {
    %c0_i32 = arith.constant 0 : i32
    %c0_i32_0 = arith.constant 0 : i32
    return %arg0, %c0_i32, %arg1 : i32, i32, i32
  }
  func.func @transform_1(%arg0: i32, %arg1: i32) -> (i32, i32, i32) {
    %c0_i32 = arith.constant 0 : i32
    %c0_i32_0 = arith.constant 0 : i32
    return %arg0, %c0_i32, %arg1 : i32, i32, i32
  }
  func.func @transform_2(%arg0: i32, %arg1: i32) -> i32 {
    %c0_i32 = arith.constant 0 : i32
    %c0_i32_0 = arith.constant 0 : i32
    return %c0_i32 : i32
  }
  func.func @transform_3(%arg0: i32, %arg1: i32) -> (i32, i32, i32, i32) {
    %c0_i32 = arith.constant 0 : i32
    %c0_i32_0 = arith.constant 0 : i32
    %c0_i32_1 = arith.constant 0 : i32
    return %arg0, %arg1, %c0_i32, %c0_i32_0 : i32, i32, i32, i32
  }
  func.func @transform_4(%arg0: i32, %arg1: i32) -> (i32, i32, i32, i32) {
    %c0_i32 = arith.constant 0 : i32
    %c0_i32_0 = arith.constant 0 : i32
    %c0_i32_1 = arith.constant 0 : i32
    return %arg0, %arg1, %c0_i32, %c0_i32_0 : i32, i32, i32, i32
  }
}

</mosaic_0001>

<llo_original>
// kernel: tpu_custom_call.1
$region0: #{tpu_custom_call.1}
  #allocation0 [shape = 'u32[]', space=smem, size = 0x4, offset = 0x4, fixed_abs, tag = 'smem constant byte address 0x4 - core index']
  #allocation1 [shape = 'u32[144,128]{1,0:T(1,128)}', space=vmem, size = 0x12000, scoped, tag = 'internal scratch']
  %s0 = inlined_call_operand.hbm [shape: f32[2,4,256], index: 0, kind: input, shape index: {}]
  %s1 = inlined_call_operand.hbm [shape: s32[2,1,256], index: 1, kind: input, shape index: {}]
  %s2 = inlined_call_operand.vmem [shape: f32[4], index: 2, kind: input, shape index: {}]
  %s3 = inlined_call_operand.hbm [shape: f32[2,1,1,128], index: 3, kind: output, shape index: {0}]
  %s4 = inlined_call_operand.hbm [shape: f32[2,1,1,128], index: 4, kind: output, shape index: {1}]
  %5 = xla_tuple %s3, %s4
  %s6 = sld [smem:[#allocation0]]
  $region65: #{tpu_custom_call.1} parent=0
    _
  %s8 = ssub.s32 1, %s6
  %s9 = scalar_select 0, %s8, %s6
  $region1: #{tpu_custom_call.1} parent=0
    #allocation2 [shape = 'u8[8192]{0}', space=vmem, size = 0x2000, scoped, tag = 'input window, operand 0']
    #allocation3 [shape = 's32[2]{0}', space=sflag, size = 0x8, scoped, tag = 'scoped memory for tpu_custom_call.1']
    #allocation4 [shape = 's32[2]{0}', space=sflag, size = 0x8, scoped, tag = 'scoped memory for tpu_custom_call.1']
    #allocation5 [shape = 's32[2]{0}', space=sflag, size = 0x8, scoped, tag = 'scoped memory for tpu_custom_call.1']
    #allocation6 [shape = 'u8[2048]{0}', space=vmem, size = 0x800, scoped, tag = 'input window, operand 1']
    #allocation7 [shape = 's32[2]{0}', space=sflag, size = 0x8, scoped, tag = 'scoped memory for tpu_custom_call.1']
    #allocation8 [shape = 'u8[512]{0}', space=smem, size = 0x200, scoped, tag = 'input window, operand 2, single buffered']
    #allocation9 [shape = 'u8[1024]{0}', space=vmem, size = 0x400, scoped, tag = 'output window, operand 0']
    #allocation10 [shape = 'u8[1024]{0}', space=vmem, size = 0x400, scoped, tag = 'output window, operand 1']
    #allocation11 [shape = 's32[2]{0}', space=sflag, size = 0x8, scoped, tag = 'scoped memory for tpu_custom_call.1']
    %10 = vsyncpa [#allocation3], 0
    %s11 = scalar_lea.sflag [#allocation3], 1
    %12 = vsyncpa %s11, 0
    %13 = vsyncpa [#allocation7], 0
    %s14 = scalar_lea.sflag [#allocation7], 1
    %15 = vsyncpa %s14, 0
    %16 = vsyncpa [#allocation5], 0
    %17 = vsyncpa [#allocation4], 0
    %s18 = scalar_lea.sflag [#allocation4], 1
    %19 = vsyncpa %s18, 0
    %20 = vsyncpa [#allocation11], 0
    %s21 = scalar_lea.sflag [#allocation11], 1
    %22 = vsyncpa %s21, 0
    loop: start=0, step=1, limit=4
    $region2: #{tpu_custom_call.1} parent=1 // loop_pre_header
      _
    $region3: #{tpu_custom_call.1} parent=1 // loop_header
      %s24 = sphi 0, %s28
      %p25 = scmp.ge.s32.totalorder %s24, 4
      %s31 = sphi 0, %s43
      %s32 = sphi 0, %s39
      %s33 = sphi 0, %s31
      %s34 = sphi 0, %s32
      %s35 = sphi 0, %s33
      %s36 = sphi 0, %s34
      %s48 = sphi 0, %s50
      %s51 = sphi 0, %s48
      %s52 = sphi 0, %s51
      %s68 = sphi 0, %s52
      %s76 = sphi 0, %s78
      %s79 = sphi 0, %s76
      %s80 = sphi 0, %s79
      %s96 = sphi 0, %s80
      %s100 = sphi 0, %s100
      %s102 = sphi 0, %s100
      %s103 = sphi 0, %s102
      %s117 = sphi 0, %s103
      %s125 = sphi 0, %s127
      %s128 = sphi 0, %s125
      %s129 = sphi 0, %s128
      %s145 = sphi 0, %s129
      %s153 = sphi 0, %s155
      %s156 = sphi 0, %s153
      %s157 = sphi 0, %s156
      %s173 = sphi 0, %s157
    $region4: #{tpu_custom_call.1} parent=1 // loop_header_branch
      %27 = sbr.rel (%p25) target = $region8
    $region5: #{tpu_custom_call.1} parent=1 // loop_body
      %s29 = ssub.s32 %s24, 1
      %s30 = ssub.s32 %s24, 2
      %s37 = sadd.s32 1, %s32
      %p38 = scmp.ge.s32.totalorder %s37, 1
      %s39 = scalar_select %p38, 0, %s37
      %s40 = sadd.s32 1, %s31
      %s41 = scalar_select %p38, %s40, %s31
      %p42 = scmp.ge.s32.totalorder %s41, 2
      %s43 = scalar_select %p42, 0, %s41
      %s44 = ssub.s32 %s31, %s43
      %s45 = ssub.s32 %s32, %s39
      %s46 = sor.u32 %s44, %s45
      %p47 = scmp.eq.s32.totalorder %s46, 0
      %s49 = sadd.s32 %s48, 1
      %s50 = scalar_select %p47, %s48, %s49
      %p53 = pneg %p47
      %p54 = scmp.eq.s32.totalorder %s24, 1
      %p55 = por %p53, %p54
      %p56 = scmp.ne.s32.totalorder %s48, %s51
      %p57 = scmp.eq.s32.totalorder %s24, 0
      %p58 = por %p56, %p57
      %p59 = scmp.ne.s32.totalorder %s48, %s51
      %p60 = scmp.eq.s32.totalorder %s29, 1
      %p61 = por %p59, %p60
      %p62 = scmp.ne.s32.totalorder %s51, %s52
      %p63 = scmp.eq.s32.totalorder %s29, 0
      %p64 = por %p62, %p63
      %p65 = scmp.ne.s32.totalorder %s51, %s52
      %p66 = scmp.eq.s32.totalorder %s30, 1
      %p67 = por %p65, %p66
      %p69 = scmp.ne.s32.totalorder %s52, %s68
      %p70 = scmp.eq.s32.totalorder %s30, 0
      %p71 = por %p69, %p70
      %s72 = ssub.s32 %s31, %s43
      %s73 = ssub.s32 %s32, %s39
      %s74 = sor.u32 %s72, %s73
      %p75 = scmp.eq.s32.totalorder %s74, 0
      %s77 = sadd.s32 %s76, 1
      %s78 = scalar_select %p75, %s76, %s77
      %p81 = pneg %p75
      %p82 = scmp.eq.s32.totalorder %s24, 1
      %p83 = por %p81, %p82
      %p84 = scmp.ne.s32.totalorder %s76, %s79
      %p85 = scmp.eq.s32.totalorder %s24, 0
      %p86 = por %p84, %p85
      %p87 = scmp.ne.s32.totalorder %s76, %s79
      %p88 = scmp.eq.s32.totalorder %s29, 1
      %p89 = por %p87, %p88
      %p90 = scmp.ne.s32.totalorder %s79, %s80
      %p91 = scmp.eq.s32.totalorder %s29, 0
      %p92 = por %p90, %p91
      %p93 = scmp.ne.s32.totalorder %s79, %s80
      %p94 = scmp.eq.s32.totalorder %s30, 1
      %p95 = por %p93, %p94
      %p97 = scmp.ne.s32.totalorder %s80, %s96
      %p98 = scmp.eq.s32.totalorder %s30, 0
      %p99 = por %p97, %p98
      %s101 = sadd.s32 %s100, 1
      %p104 = scmp.eq.s32.totalorder %s24, 1
      %p105 = scmp.ne.s32.totalorder %s100, %s102
      %p106 = scmp.eq.s32.totalorder %s24, 0
      %p107 = por %p105, %p106
      %p108 = scmp.ne.s32.totalorder %s100, %s102
      %p109 = scmp.eq.s32.totalorder %s29, 1
      %p110 = por %p108, %p109
      %p111 = scmp.ne.s32.totalorder %s102, %s103
      %p112 = scmp.eq.s32.totalorder %s29, 0
      %p113 = por %p111, %p112
      %p114 = scmp.ne.s32.totalorder %s102, %s103
      %p115 = scmp.eq.s32.totalorder %s30, 1
      %p116 = por %p114, %p115
      %p118 = scmp.ne.s32.totalorder %s103, %s117
      %p119 = scmp.eq.s32.totalorder %s30, 0
      %p120 = por %p118, %p119
      %s121 = ssub.s32 %s31, %s43
      %s122 = ssub.s32 %s32, %s39
      %s123 = sor.u32 %s121, %s122
      %p124 = scmp.eq.s32.totalorder %s123, 0
      %s126 = sadd.s32 %s125, 1
      %s127 = scalar_select %p124, %s125, %s126
      %p130 = pneg %p124
      %p131 = scmp.eq.s32.totalorder %s24, 1
      %p132 = por %p130, %p131
      %p133 = scmp.ne.s32.totalorder %s125, %s128
      %p134 = scmp.eq.s32.totalorder %s24, 0
      %p135 = por %p133, %p134
      %p136 = scmp.ne.s32.totalorder %s125, %s128
      %p137 = scmp.eq.s32.totalorder %s29, 1
      %p138 = por %p136, %p137
      %p139 = scmp.ne.s32.totalorder %s128, %s129
      %p140 = scmp.eq.s32.totalorder %s29, 0
      %p141 = por %p139, %p140
      %p142 = scmp.ne.s32.totalorder %s128, %s129
      %p143 = scmp.eq.s32.totalorder %s30, 1
      %p144 = por %p142, %p143
      %p146 = scmp.ne.s32.totalorder %s129, %s145
      %p147 = scmp.eq.s32.totalorder %s30, 0
      %p148 = por %p146, %p147
      %s149 = ssub.s32 %s31, %s43
      %s150 = ssub.s32 %s32, %s39
      %s151 = sor.u32 %s149, %s150
      %p152 = scmp.eq.s32.totalorder %s151, 0
      %s154 = sadd.s32 %s153, 1
      %s155 = scalar_select %p152, %s153, %s154
      %p158 = pneg %p152
      %p159 = scmp.eq.s32.totalorder %s24, 1
      %p160 = por %p158, %p159
      %p161 = scmp.ne.s32.totalorder %s153, %s156
      %p162 = scmp.eq.s32.totalorder %s24, 0
      %p163 = por %p161, %p162
      %p164 = scmp.ne.s32.totalorder %s153, %s156
      %p165 = scmp.eq.s32.totalorder %s29, 1
      %p166 = por %p164, %p165
      %p167 = scmp.ne.s32.totalorder %s156, %s157
      %p168 = scmp.eq.s32.totalorder %s29, 0
      %p169 = por %p167, %p168
      %p170 = scmp.ne.s32.totalorder %s156, %s157
      %p171 = scmp.eq.s32.totalorder %s30, 1
      %p172 = por %p170, %p171
      %p174 = scmp.ne.s32.totalorder %s157, %s173
      %p175 = scmp.eq.s32.totalorder %s30, 0
      %p176 = por %p174, %p175
      %p177 = scmp.le.s32.totalorder 1, %s24
      %p178 = scmp.lt.s32.totalorder %s24, 3
      %p179 = pnand %p177, %p178
      %p180 = pneg %p179
      // Predicated region
      $region9: #{tpu_custom_call.1} parent=5 // pred_check
        _
      $region10: #{tpu_custom_call.1} parent=5 // pred_check_branch
        %182 = sbr.rel (%p179) target = $region12
      $region11: #{tpu_custom_call.1} parent=5 // pred_region
        %s183 = ssub.s32 %s24, 1
        // Predicated region
        $region13: #{tpu_custom_call.1} parent=11 // pred_check
          %p184 = pneg %p113
        $region14: #{tpu_custom_call.1} parent=11 // pred_check_branch
          %186 = sbr.rel (%p184) target = $region16
        $region15: #{tpu_custom_call.1} parent=11 // pred_region
          %s188 = ssub.s32 16, 16
          %189 = vsyncadd [#allocation5], %s188
          %s191 = sshll.u32 %s2, 4
          %s192 = int_to_ptr.vmem [resolvable:$true] %s191
          %194 = dma.vmem_to_smem %s192, 16, [#allocation8], [#allocation5]
        $region16: #{tpu_custom_call.1} parent=11 // pred_fallthru
          _
      $region12: #{tpu_custom_call.1} parent=5 // pred_fallthru
        _
      %p195 = scmp.lt.s32.totalorder %s24, 2
      // Predicated region
      $region17: #{tpu_custom_call.1} parent=5 // pred_check
        %p196 = pneg %p195
      $region18: #{tpu_custom_call.1} parent=5 // pred_check_branch
        %198 = sbr.rel (%p196) target = $region20
      $region19: #{tpu_custom_call.1} parent=5 // pred_region
        // Predicated region
        $region21: #{tpu_custom_call.1} parent=19 // pred_check
          %p199 = pneg %p58
        $region22: #{tpu_custom_call.1} parent=19 // pred_check_branch
          %201 = sbr.rel (%p199) target = $region24
        $region23: #{tpu_custom_call.1} parent=19 // pred_region
          %s202 = sand.u32 %s48, 1
          %s203 = scalar_lea.sflag [#allocation3], %s202
          %s204 = sand.u32 %s48, 1
          %s205 = smul.addr %s204, 8
          %s206 = scalar_lea.vmem [#allocation2], %s205
          %s207 = smul.u32 2, %s32
          %s209 = ssub.s32 128, 128
          %210 = vsyncadd %s203, %s209
          %s211 = smul.addr %s31, 2
          %s212 = sadd.s32 %s207, %s211
          %s213 = smul.addr %s212, 64
          %s214 = scalar_lea.hbm %s0, %s213
          %s216 = sshll.u32 %s206, 4
          %s217 = int_to_ptr.vmem [resolvable:$true] %s216
          %219 = dma.hbm_to_vmem [thread:$0]  %s214, 128, %s217, %s203
        $region24: #{tpu_custom_call.1} parent=19 // pred_fallthru
          _
        // Predicated region
        $region25: #{tpu_custom_call.1} parent=19 // pred_check
          %p220 = pneg %p86
        $region26: #{tpu_custom_call.1} parent=19 // pred_check_branch
          %222 = sbr.rel (%p220) target = $region28
        $region27: #{tpu_custom_call.1} parent=19 // pred_region
          %s223 = sand.u32 %s76, 1
          %s224 = scalar_lea.sflag [#allocation7], %s223
          %s225 = sand.u32 %s76, 1
          %s226 = smul.addr %s225, 2
          %s227 = scalar_lea.vmem [#allocation6], %s226
          %s228 = smul.u32 2, %s32
          %s230 = ssub.s32 32, 32
          %231 = vsyncadd %s224, %s230
          %s232 = smul.addr %s31, 2
          %s233 = sadd.s32 %s228, %s232
          %s234 = smul.addr %s233, 16
          %s235 = scalar_lea.hbm %s1, %s234
          %s237 = sshll.u32 %s227, 4
          %s238 = int_to_ptr.vmem [resolvable:$true] %s237
          %240 = dma.hbm_to_vmem [thread:$0]  %s235, 32, %s238, %s224
        $region28: #{tpu_custom_call.1} parent=19 // pred_fallthru
          _
      $region20: #{tpu_custom_call.1} parent=5 // pred_fallthru
        _
      %p241 = scmp.le.s32.totalorder 1, %s24
      %p242 = scmp.lt.s32.totalorder %s24, 3
      %p243 = pnand %p241, %p242
      %p244 = pneg %p243
      // Predicated region
      $region29: #{tpu_custom_call.1} parent=5 // pred_check
        _
      $region30: #{tpu_custom_call.1} parent=5 // pred_check_branch
        %246 = sbr.rel (%p243) target = $region32
      $region31: #{tpu_custom_call.1} parent=5 // pred_region
        %s247 = ssub.s32 %s24, 1
        %s248 = sand.u32 %s51, 1
        %s249 = scalar_lea.sflag [#allocation3], %s248
        %s250 = sand.u32 %s51, 1
        %s251 = smul.addr %s250, 8
        %s252 = scalar_lea.vmem [#allocation2], %s251
        // Predicated region
        $region33: #{tpu_custom_call.1} parent=31 // pred_check
          %p253 = pneg %p64
        $region34: #{tpu_custom_call.1} parent=31 // pred_check_branch
          %255 = sbr.rel (%p253) target = $region36
        $region35: #{tpu_custom_call.1} parent=31 // pred_region
          %256 = dma.done %s249, 128
        $region36: #{tpu_custom_call.1} parent=31 // pred_fallthru
          _
        %s257 = sand.u32 %s79, 1
        %s258 = scalar_lea.sflag [#allocation7], %s257
        %s259 = sand.u32 %s79, 1
        %s260 = smul.addr %s259, 2
        %s261 = scalar_lea.vmem [#allocation6], %s260
        // Predicated region
        $region37: #{tpu_custom_call.1} parent=31 // pred_check
          %p262 = pneg %p92
        $region38: #{tpu_custom_call.1} parent=31 // pred_check_branch
          %264 = sbr.rel (%p262) target = $region40
        $region39: #{tpu_custom_call.1} parent=31 // pred_region
          %265 = dma.done %s258, 32
        $region40: #{tpu_custom_call.1} parent=31 // pred_fallthru
          _
        // Predicated region
        $region41: #{tpu_custom_call.1} parent=31 // pred_check
          %p266 = pneg %p113
        $region42: #{tpu_custom_call.1} parent=31 // pred_check_branch
          %268 = sbr.rel (%p266) target = $region44
        $region43: #{tpu_custom_call.1} parent=31 // pred_region
          %269 = dma.done [#allocation5], 16
        $region44: #{tpu_custom_call.1} parent=31 // pred_fallthru
          _
        %270 = sfence
        %s271 = sand.u32 %s51, 1
        %s272 = scalar_lea.sflag [#allocation3], %s271
        %s273 = sand.u32 %s51, 1
        %s274 = smul.addr %s273, 8
        %s275 = scalar_lea.vmem [#allocation2], %s274
        %p276 = pneg %p64
        %p277 = pneg %p61
        %s278 = sand.u32 %s79, 1
        %s279 = scalar_lea.sflag [#allocation7], %s278
        %s280 = sand.u32 %s79, 1
        %s281 = smul.addr %s280, 2
        %s282 = scalar_lea.vmem [#allocation6], %s281
        %p283 = pneg %p92
        %p284 = pneg %p89
        %p285 = pneg %p113
        %p286 = pneg %p110
        %p287 = pneg %p141
        %p288 = pneg %p138
        %s289 = sand.u32 %s128, 1
        %s290 = scalar_lea.sflag [#allocation4], %s289
        %s291 = sand.u32 %s128, 1
        %s292 = scalar_lea.vmem [#allocation9], %s291
        %p293 = pneg %p169
        %p294 = pneg %p166
        %s295 = sand.u32 %s156, 1
        %s296 = scalar_lea.sflag [#allocation11], %s295
        %s297 = sand.u32 %s156, 1
        %s298 = scalar_lea.vmem [#allocation10], %s297
        %s299 = smul.u32 2, %s34
        %s300 = smul.u32 2, %s34
        %s301 = smul.u32 %s34, 256
        %v302 = vlaneseq
        %v303 = vshrl.u32 %v302, 7
        %v304 = vlaneseq
        %v305 = vand.u32 %v304, 127
        %v306 = vadd.s32 %v305, 128
        %s307 = sld [smem:[#allocation8]]
        %s308 = sld [smem:[#allocation8 + $0x1]]
        %s309 = sld [smem:[#allocation8 + $0x2]]
        %s310 = sld [smem:[#allocation8 + $0x3]]
        %v311 = vld [vmem:[%s252] sm:$0xff]
        %v312 = vld [vmem:[%s261] sm:$0x3]
        %v314 = vcombine.high %v311, %v311
        %vm316 = vcmask 1043456
        %v317 = vsel %vm316, %v311, -inf
        %v318 = vrot.slane %v317, 4
        %v319 = vmax.f32 %v317, %v318
        %v320 = vrot.slane %v319, 2
        %v321 = vmax.f32 %v319, %v320
        %v322 = vrot.slane %v321, 1
        %v323 = vmax.f32 %v321, %v322
        %v324 = vsel %vm316, %v314, -inf
        %v325 = vrot.slane %v324, 4
        %v326 = vmax.f32 %v324, %v325
        %v327 = vrot.slane %v326, 2
        %v328 = vmax.f32 %v326, %v327
        %v329 = vrot.slane %v328, 1
        %v330 = vmax.f32 %v328, %v329
        %v333 = vcombine.low %v323, %v330
        %v335 = vsub.f32 %v311, %v333
        %v336 = vmul.f32 %v335, 1.442695
        %v337 = vpow.pop %v336
        %v339 = vcombine.high %v337, %v337
        %v341 = vsel %vm316, %v337, 0.0
        %v342 = vrot.slane %v341, 4
        %v343 = vadd.f32 %v341, %v342
        %v344 = vrot.slane %v343, 2
        %v345 = vadd.f32 %v343, %v344
        %v346 = vrot.slane %v345, 1
        %v347 = vadd.f32 %v345, %v346
        %v348 = vsel %vm316, %v339, 0.0
        %v349 = vrot.slane %v348, 4
        %v350 = vadd.f32 %v348, %v349
        %v351 = vrot.slane %v350, 2
        %v352 = vadd.f32 %v350, %v351
        %v353 = vrot.slane %v352, 1
        %v354 = vadd.f32 %v352, %v353
        %v355 = vlog2.pop %v347
        %v356 = vmul.f32 %v355, 0.6931472
        %v357 = vlog2.pop %v354
        %v358 = vmul.f32 %v357, 0.6931472
        %v359 = vadd.f32 %v323, %v356
        %v360 = vadd.f32 %v330, %v358
        %v361 = vlaneseq
        %v362 = vshrl.u32 %v361, 7
        %v363 = vsub.s32 0, %v362
        %v364 = vrot.slane %v312, %v363
        %v365 = vlaneseq
        %v366 = vshrl.u32 %v365, 7
        %v367 = vsub.s32 1, %v366
        %v368 = vrot.slane %v312, %v367
        %vm369 = vcmp.eq.s32.totalorder %v303, %v364
        %vm370 = vcmp.eq.s32.totalorder %v303, %v368
        %v371 = vsel %vm369, %v311, 0.0
        %v372 = vsel %vm370, %v314, 0.0
        %v373 = vsel %vm316, %v371, 0.0
        %v374 = vrot.slane %v373, 4
        %v375 = vadd.f32 %v373, %v374
        %v376 = vrot.slane %v375, 2
        %v377 = vadd.f32 %v375, %v376
        %v378 = vrot.slane %v377, 1
        %v379 = vadd.f32 %v377, %v378
        %v380 = vsel %vm316, %v372, 0.0
        %v381 = vrot.slane %v380, 4
        %v382 = vadd.f32 %v380, %v381
        %v383 = vrot.slane %v382, 2
        %v384 = vadd.f32 %v382, %v383
        %v385 = vrot.slane %v384, 1
        %v386 = vadd.f32 %v384, %v385
        %vm387 = vcmp.eq.s32.totalorder %v312, 0
        %v388 = vstv %s307
        %v389 = vsel %vm387, %v388, 0.0
        %vm390 = vcmp.eq.s32.totalorder %v312, 1
        %v391 = vstv %s308
        %v392 = vsel %vm390, %v391, %v389
        %vm393 = vcmp.eq.s32.totalorder %v312, 2
        %v394 = vstv %s309
        %v395 = vsel %vm393, %v394, %v392
        %vm396 = vcmp.eq.s32.totalorder %v312, 3
        %v397 = vstv %s310
        %v398 = vsel %vm396, %v397, %v395
        %v399 = vsub.f32 %v379, %v359
        %v400 = vsub.f32 %v386, %v360
        %v401 = vmul.f32 %v399, 1.442695
        %v402 = vpow.pop %v401
        %v403 = vmul.f32 %v400, 1.442695
        %v404 = vpow.pop %v403
        %v405 = vmax.f32 %v399, -13.815511
        %v406 = vmax.f32 %v400, -13.815511
        %v407 = vsub.f32 1.0, %v402
        %v408 = vsub.f32 1.0, %v404
        %v409 = vsub.f32 0.0, %v407
        %v410 = vsub.f32 0.0, %v408
        %v411 = vmul.f32 %v409, %v405
        %v412 = vmul.f32 %v410, %v406
        %v414 = vlaneseq
        %v415 = vshrl.u32 %v414, 7
        %v416 = vsub.s32 0, %v415
        %v417 = vrot.slane %v398, %v416
        %v418 = vlaneseq
        %v419 = vshrl.u32 %v418, 7
        %v420 = vsub.s32 1, %v419
        %v421 = vrot.slane %v398, %v420
        %v424 = vmul.f32 %v411, %v417
        %v425 = vmul.f32 %v412, %v421
        %s426 = sadd.s32 %s301, 0
        %v427 = vstv %s426
        %v428 = vadd.s32 %v305, %v427
        %v429 = vadd.s32 %v306, %v427
        %vm430 = vcmp.lt.s32.totalorder %v428, 256
        %vm431 = vcmp.lt.s32.totalorder %v429, 256
        %v432 = vsel %vm430, %v424, 0.0
        %v433 = vsel %vm431, %v425, 0.0
        %v434 = vadd.f32 %v432, 0.0
        %v435 = vadd.f32 %v433, 0.0
        %v436 = vsel %vm430, 1.0, 0.0
        %v437 = vsel %vm431, 1.0, 0.0
        %v438 = vadd.f32 %v436, 0.0
        %v439 = vadd.f32 %v437, 0.0
        %vm440 = vcmask 1040384
        %v441 = vsel %vm440, %v434, 0.0
        %v442 = vsel %vm440, %v435, 0.0
        %v443 = vadd.f32 %v441, %v442
        %444 = vadd.xlane.f32.xlu0 %v443
        %v445 = vpop.xlane.xlu0 %444
        %446 = vst [vmem:[%s292] sm:$0x1] %v445
        %v447 = vadd.f32 %v438, %v439
        %448 = vadd.xlane.f32.xlu0 %v447
        %v449 = vpop.xlane.xlu0 %448
        %450 = vst [vmem:[%s298] sm:$0x1] %v449
        %s451 = sand.u32 %s128, 1
        %s452 = scalar_lea.sflag [#allocation4], %s451
        %s453 = sand.u32 %s128, 1
        %s454 = scalar_lea.vmem [#allocation9], %s453
        %s455 = sand.u32 %s156, 1
        %s456 = scalar_lea.sflag [#allocation11], %s455
        %s457 = sand.u32 %s156, 1
        %s458 = scalar_lea.vmem [#allocation10], %s457
        // Predicated region
        $region45: #{tpu_custom_call.1} parent=31 // pred_check
          %p459 = pneg %p138
        $region46: #{tpu_custom_call.1} parent=31 // pred_check_branch
          %461 = sbr.rel (%p459) target = $region48
        $region47: #{tpu_custom_call.1} parent=31 // pred_region
          %s463 = ssub.s32 16, 16
          %464 = vsyncadd %s452, %s463
          %s465 = sadd.s32 %s34, %s33
          %s466 = smul.addr %s465, 16
          %s467 = scalar_lea.hbm %s3, %s466
          %s469 = sshll.u32 %s454, 4
          %s470 = int_to_ptr.vmem [resolvable:$true] %s469
          %472 = dma.vmem_to_hbm [thread:$0]  %s470, 16, %s467, %s452
        $region48: #{tpu_custom_call.1} parent=31 // pred_fallthru
          _
        // Predicated region
        $region49: #{tpu_custom_call.1} parent=31 // pred_check
          %p473 = pneg %p166
        $region50: #{tpu_custom_call.1} parent=31 // pred_check_branch
          %475 = sbr.rel (%p473) target = $region52
        $region51: #{tpu_custom_call.1} parent=31 // pred_region
          %s477 = ssub.s32 16, 16
          %478 = vsyncadd %s456, %s477
          %s479 = sadd.s32 %s34, %s33
          %s480 = smul.addr %s479, 16
          %s481 = scalar_lea.hbm %s4, %s480
          %s483 = sshll.u32 %s458, 4
          %s484 = int_to_ptr.vmem [resolvable:$true] %s483
          %486 = dma.vmem_to_hbm [thread:$0]  %s484, 16, %s481, %s456
        $region52: #{tpu_custom_call.1} parent=31 // pred_fallthru
          _
      $region32: #{tpu_custom_call.1} parent=5 // pred_fallthru
        _
      %p487 = scmp.le.s32.totalorder 2, %s24
      // Predicated region
      $region53: #{tpu_custom_call.1} parent=5 // pred_check
        %p488 = pneg %p487
      $region54: #{tpu_custom_call.1} parent=5 // pred_check_branch
        %490 = sbr.rel (%p488) target = $region56
      $region55: #{tpu_custom_call.1} parent=5 // pred_region
        %s491 = ssub.s32 %s24, 2
        // Predicated region
        $region57: #{tpu_custom_call.1} parent=55 // pred_check
          %p492 = pneg %p144
        $region58: #{tpu_custom_call.1} parent=55 // pred_check_branch
          %494 = sbr.rel (%p492) target = $region60
        $region59: #{tpu_custom_call.1} parent=55 // pred_region
          %s495 = sand.u32 %s129, 1
          %s496 = scalar_lea.sflag [#allocation4], %s495
          %s497 = sand.u32 %s129, 1
          %s498 = scalar_lea.vmem [#allocation9], %s497
          %499 = dma.done %s496, 16
        $region60: #{tpu_custom_call.1} parent=55 // pred_fallthru
          _
        // Predicated region
        $region61: #{tpu_custom_call.1} parent=55 // pred_check
          %p500 = pneg %p172
        $region62: #{tpu_custom_call.1} parent=55 // pred_check_branch
          %502 = sbr.rel (%p500) target = $region64
        $region63: #{tpu_custom_call.1} parent=55 // pred_region
          %s503 = sand.u32 %s157, 1
          %s504 = scalar_lea.sflag [#allocation11], %s503
          %s505 = sand.u32 %s157, 1
          %s506 = scalar_lea.vmem [#allocation10], %s505
          %507 = dma.done %s504, 16
        $region64: #{tpu_custom_call.1} parent=55 // pred_fallthru
          _
      $region56: #{tpu_custom_call.1} parent=5 // pred_fallthru
        _
    $region6: #{tpu_custom_call.1} parent=1 // loop_footer
      %s28 = sadd.s32 1, %s24
    $region7: #{tpu_custom_call.1} parent=1 // loop_footer_branch
      %23 = sbr.rel target = $region3
    $region8: #{tpu_custom_call.1} parent=1 // loop_exit
      _
    %508 = vsyncpa [#allocation3], 1
    %s509 = scalar_lea.sflag [#allocation3], 1
    %510 = vsyncpa %s509, 1
    %511 = vsyncpa [#allocation7], 1
    %s512 = scalar_lea.sflag [#allocation7], 1
    %513 = vsyncpa %s512, 1
    %514 = vsyncpa [#allocation4], 1
    %s515 = scalar_lea.sflag [#allocation4], 1
    %516 = vsyncpa %s515, 1
    %517 = vsyncpa [#allocation11], 1
    %s518 = scalar_lea.sflag [#allocation11], 1
    %519 = vsyncpa %s518, 1
    %520 = vsyncpa [#allocation5], 1
    %s521 = scalar_lea.sflag [#allocation5], 1
    %522 = vsyncpa %s521, 1

</llo_original>
